<compile_context>
chip_gen: v7x
topology: tpu7x:2x2x1
jax: 0.10.0
libtpu: 0.0.40
codegen_flags: <defaults>
</compile_context>

<pallas_src>
import functools

import numpy as np
import jax
import jax.numpy as jnp
from jax import lax
from jax.experimental import pallas as pl
from jax.experimental.pallas import tpu as pltpu

EPS = 1e-5
FINF = float(np.finfo(np.float32).max)   # torch.finfo(float32).max


def _full_spec(shape):
    """BlockSpec covering the whole array (used with grid=(1,))."""
    zeros = (0,) * len(shape)
    return pl.BlockSpec(shape, lambda *_: zeros)


# --------------------------------------------------------------------------
# Kernel A: encode_k hot path   k_emb = wv(label) + feature @ Wf^T + bf
#   - whole batch flattened to (B*K, F): one MXU matmul, one full-tile store
# --------------------------------------------------------------------------
def _encode_k_kernel(emb_ref, feat_ref, wft_ref, bf_ref, out_ref):
    f_emb = jnp.dot(feat_ref[...], wft_ref[...],          # bf16 in, f32 accumulate
                    preferred_element_type=jnp.float32)
    out_ref[...] = emb_ref[...] + f_emb + bf_ref[...]


def encode_k(label_emb, feature, wf, bf):
    B, K, E = label_emb.shape
    F = feature.shape[-1]
    emb2 = label_emb.reshape(B * K, E)
    feat2 = feature.reshape(B * K, F).astype(jnp.bfloat16)
    wf_t = wf.T.astype(jnp.bfloat16)                       # (F, E), transposed once
    out = pl.pallas_call(
        _encode_k_kernel,
        out_shape=jax.ShapeDtypeStruct((B * K, E), jnp.float32),
        grid=(1,),     # whole batch per step: per-b grid would be pure overhead
        in_specs=[_full_spec((B * K, E)),
                  _full_spec((B * K, F)),
                  _full_spec((F, E)),
                  _full_spec((1, E))],
        out_specs=_full_spec((B * K, E)),
        compiler_params=pltpu.CompilerParams(dimension_semantics=("arbitrary",)),
    )(emb2, feat2, wf_t, bf)
    return out.reshape(B, K, E)


# --------------------------------------------------------------------------
# Kernel B: length-aware bidirectional LSTM (DynamicLSTM / pad_packed_sequence
# semantics: outputs are zero past the valid length) fused with linear_rnn and
# the residual add:   hidden = caption + fwd@Wrnn_f + bwd@Wrnn_b + brnn
#
# Time-major flattened layout: row = t*B + b.  The recurrence carry is (B, H);
# the x@Wih precompute (both directions at once) and the output projection are
# single big 2-D matmuls.  Forward and backward steps are interleaved in one
# loop so their independent dependency chains overlap.
# --------------------------------------------------------------------------
def _bilstm_kernel(x_ref, mask_ref,
                   wih_ref, bih_ref,
                   whh_f_ref, whh_b_ref,
                   wrnn_f_ref, wrnn_b_ref, brnn_ref,
                   out_ref,
                   fwd_scr, bwd_scr, xg_scr,
                   *, seq_len, batch):
    S, Bt = seq_len, batch
    H = whh_f_ref.shape[0]
    G = 4 * H

    # Input-gate contributions for all timesteps and BOTH directions in one
    # big bf16 MXU matmul (f32 accumulation) with fused bias add.
    x16 = x_ref[...].astype(jnp.bfloat16)                             # (S*B, E)
    xg_scr[...] = jnp.dot(x16, wih_ref[...],
                          preferred_element_type=jnp.float32) + bih_ref[...]

    whh_f_t = whh_f_ref[...]      # (H, 4H) f32: recurrence kept in f32 (accuracy;
    whh_b_t = whh_b_ref[...]      # it is latency-bound, not throughput-bound)

    def cell(h, c, xg_t, whh_t):
        # batched recurrent matmul: (B, H) @ (H, 4H)
        gates = xg_t + jnp.dot(h, whh_t, preferred_element_type=jnp.float32)
        i = jax.nn.sigmoid(gates[:, 0:H])
        f = jax.nn.sigmoid(gates[:, H:2 * H])
        g = jnp.tanh(gates[:, 2 * H:3 * H])
        o = jax.nn.sigmoid(gates[:, 3 * H:4 * H])
        c_new = f * c + i * g
        return o * jnp.tanh(c_new), c_new

    def row(t):
        r = t * Bt
        if Bt % 8 == 0:                     # alignment hint when rows are 8-aligned
            r = pl.multiple_of(r, 8)
        return r

    h0 = jnp.zeros((Bt, H), jnp.float32)
    c0 = jnp.zeros((Bt, H), jnp.float32)
    unroll = True if S <= 16 else 8         # full unroll for short sequences

    # One loop, both directions: fwd at t = i, bwd at t = S-1-i (independent
    # carries -> adjacent-step MXU/EUP work can overlap).
    # Forward outputs past the valid length are zeroed by the mask (the carry
    # needs no masking: t < L never depends on t >= L).  The backward carry
    # must stay zero until t == L-1, hence the per-row carry mask.
    def body(i, carry):
        h_f, c_f, h_b, c_b = carry

        rf = row(i)
        h_f, c_f = cell(h_f, c_f,
                        xg_scr[pl.ds(rf, Bt), pl.ds(0, G)], whh_f_t)
        fwd_scr[pl.ds(rf, Bt), :] = mask_ref[pl.ds(rf, Bt), :] * h_f

        rb = row(S - 1 - i)
        m = mask_ref[pl.ds(rb, Bt), :]                                 # (B, 1)
        h_new, c_new = cell(h_b, c_b,
                            xg_scr[pl.ds(rb, Bt), pl.ds(G, G)], whh_b_t)
        h_b = m * h_new + (1.0 - m) * h_b
        c_b = m * c_new + (1.0 - m) * c_b
        bwd_scr[pl.ds(rb, Bt), :] = m * h_new

        return h_f, c_f, h_b, c_b

    lax.fori_loop(0, S, body, (h0, c0, h0, c0), unroll=unroll)

    # linear_rnn with split weight (no fwd/bwd concat copy) + residual add.
    rnn_feat = (jnp.dot(fwd_scr[...].astype(jnp.bfloat16), wrnn_f_ref[...],
                        preferred_element_type=jnp.float32)
                + jnp.dot(bwd_scr[...].astype(jnp.bfloat16), wrnn_b_ref[...],
                          preferred_element_type=jnp.float32)
                + brnn_ref[...])
    out_ref[...] = x_ref[...] + rnn_feat


def bilstm_hidden(lengths, caption_emb, wih_f, whh_f, b_f,
                  wih_b, whh_b, b_b, wrnn, brnn):
    B, S, E = caption_emb.shape
    H = whh_f.shape[1]
    bf16 = jnp.bfloat16

    # One-time layout plumbing in XLA: time-major, rows flattened (row = t*B + b),
    # plus the per-(t, b) validity mask replacing in-kernel scalar length handling.
    x_tm = jnp.transpose(caption_emb, (1, 0, 2)).reshape(S * B, E)
    tmask = (lax.broadcasted_iota(jnp.int32, (S, B), 0) < lengths[None, :])
    tmask = tmask.astype(jnp.float32).reshape(S * B, 1)

    # Pre-transposed weights (once, outside the kernel).
    wih_cat = jnp.concatenate([wih_f.T, wih_b.T], axis=1).astype(bf16)   # (E, 8H)
    b_cat = jnp.concatenate([b_f, b_b], axis=1)                          # (1, 8H)
    whh_f_t = whh_f.T                        # (H, 4H) f32
    whh_b_t = whh_b.T
    wrnn_f_t = wrnn[:, :H].T.astype(bf16)    # (H, E)
    wrnn_b_t = wrnn[:, H:].T.astype(bf16)    # (H, E)

    kernel = functools.partial(_bilstm_kernel, seq_len=S, batch=B)
    # TODO(synk): for large B, tile the batch (Bt a multiple of 8), mark the grid
    # axis "parallel" (v7x 2-TC sharding), and budget the tile for v7x's 64 MiB VMEM.
    hidden_tm = pl.pallas_call(
        kernel,
        out_shape=jax.ShapeDtypeStruct((S * B, E), jnp.float32),
        grid=(1,),
        in_specs=[_full_spec((S * B, E)),
                  _full_spec((S * B, 1)),
                  _full_spec((E, 8 * H)), _full_spec((1, 8 * H)),
                  _full_spec((H, 4 * H)), _full_spec((H, 4 * H)),
                  _full_spec((H, E)), _full_spec((H, E)), _full_spec((1, E))],
        out_specs=_full_spec((S * B, E)),
        scratch_shapes=[
            pltpu.VMEM((S * B, H), jnp.float32),       # forward outputs (masked)
            pltpu.VMEM((S * B, H), jnp.float32),       # backward outputs (masked)
            pltpu.VMEM((S * B, 8 * H), jnp.float32),   # x @ [Wih_f^T | Wih_b^T] + b
        ],
        compiler_params=pltpu.CompilerParams(dimension_semantics=("arbitrary",)),
    )(x_tm, tmask, wih_cat, b_cat, whh_f_t, whh_b_t,
      wrnn_f_t, wrnn_b_t, brnn)
    return hidden_tm.reshape(S, B, E).transpose(1, 0, 2)    # back to (B, S, E)


# --------------------------------------------------------------------------
# Kernel C: cross attention + folded output projection (wp + eps*wm)
#   whole batch per invocation; scores kept K-major so softmax-over-K is a
#   sublane reduction; softmax divides use the EUP approx reciprocal.
# --------------------------------------------------------------------------
def _cross_atten_kernel(hid_ref, kemb_ref, mask_ref, w_ref, b_ref, out_ref):
    h = hid_ref[...]                                    # (B, S, E) f32
    ke = kemb_ref[...]                                  # (B, K, E) f32
    mask = mask_ref[...]                                # (B, Q, S) f32
    B, S, E = h.shape
    Q = mask.shape[1]

    # att[b, k, s] = <hidden[b, s], k_emb[b, k]> / sqrt(E)
    attT = jnp.einsum("bkd,bsd->bks", ke, h,
                      preferred_element_type=jnp.float32) * (1.0 / float(np.sqrt(E)))
    attT = attT - jnp.max(attT, axis=1, keepdims=True)
    ea = jnp.exp(attT)
    # only max_k softmax(att) is needed downstream
    max_att = jnp.max(ea, axis=1, keepdims=True) * pl.reciprocal(
        jnp.sum(ea, axis=1, keepdims=True), approx=True)             # (B, 1, S)

    qatt = jnp.where(mask > 0.0, jnp.broadcast_to(max_att, (B, Q, S)), -FINF)
    qatt = qatt - jnp.max(qatt, axis=-1, keepdims=True)
    qe = jnp.exp(qatt)
    qnorm = qe * pl.reciprocal(jnp.sum(qe, axis=-1, keepdims=True), approx=True)

    p = jnp.einsum("bqs,bsd->bqd", qnorm, h,
                   preferred_element_type=jnp.float32)               # (B, Q, E)

    w = w_ref[...]                                      # (E, E) bf16, wp + eps*wm (folded)
    bias = b_ref[...]                                   # (1, E) f32, bp + eps*bm
    for b in range(B):                                  # static unroll; 2-D MXU feeds
        out_ref[b] = jnp.dot(p[b].astype(jnp.bfloat16), w,
                             preferred_element_type=jnp.float32) + bias


def cross_atten(hidden, k_emb, span_mask, wp, bp, wm, bm):
    B, S, E = hidden.shape
    K = k_emb.shape[1]
    Q = span_mask.shape[1]
    # exact algebra: p@wp.T + bp + eps*(p@wm.T + bm) == p@(wp+eps*wm).T + (bp+eps*bm)
    w_fold_t = (wp + EPS * wm).T.astype(jnp.bfloat16)   # (E, E)
    b_fold = bp + EPS * bm                               # (1, E)
    return pl.pallas_call(
        _cross_atten_kernel,
        out_shape=jax.ShapeDtypeStruct((B, Q, E), jnp.float32),
        grid=(1,),
        in_specs=[_full_spec((B, S, E)),
                  _full_spec((B, K, E)),
                  _full_spec((B, Q, S)),
                  _full_spec((E, E)),
                  _full_spec((1, E))],
        out_specs=_full_spec((B, Q, E)),
        compiler_params=pltpu.CompilerParams(dimension_semantics=("arbitrary",)),
    )(hidden, k_emb, span_mask, w_fold_t, b_fold)


# --------------------------------------------------------------------------
# Full forward (Pallas kernels + JAX glue for embedding gathers)
# --------------------------------------------------------------------------
def mat_rnn_forward(params, caption_id, phrase_span_mask, length, label, feature):
    vec = params["vectors"]
    # encode_k
    label_emb = vec[label]                                           # gather (glue)
    k_emb = encode_k(label_emb, feature, params["wf"], params["bf"])
    # encode_p
    caption = vec[caption_id]                                        # gather (glue)
    hidden = bilstm_hidden(length, caption,
                           params["wih_f"], params["whh_f"], params["b_f"],
                           params["wih_b"], params["whh_b"], params["b_b"],
                           params["wrnn"], params["brnn"])
    p_emb = cross_atten(hidden, k_emb, phrase_span_mask,
                        params["wp"], params["bp"], params["wm"], params["bm"])
    return p_emb, k_emb


# --------------------------------------------------------------------------
# Pure numpy reference (mirrors the PyTorch forward, eval mode)
# --------------------------------------------------------------------------
def _np_sigmoid(x):
    return 1.0 / (1.0 + np.exp(-x))


def _np_softmax(x, axis):
    m = x.max(axis=axis, keepdims=True)
    e = np.exp(x - m)
    return e / e.sum(axis=axis, keepdims=True)


def reference_forward(params, caption_id, phrase_span_mask, length, label, feature):
    P = {k: np.asarray(v) for k, v in params.items()}
    caption_id = np.asarray(caption_id)
    span_mask = np.asarray(phrase_span_mask)
    length = np.asarray(length)
    label = np.asarray(label)
    feature = np.asarray(feature, np.float32)

    vec = P["vectors"]
    k_emb = vec[label] + feature @ P["wf"].T + P["bf"][0]
    cap = vec[caption_id]
    B, S, E = cap.shape
    H = E
    Q = span_mask.shape[1]

    def run_dir(x_seq, wih, whh, bias):
        h = np.zeros((H,), np.float32)
        c = np.zeros((H,), np.float32)
        outs = []
        for t in range(x_seq.shape[0]):
            g = wih @ x_seq[t] + whh @ h + bias
            i = _np_sigmoid(g[:H]); f = _np_sigmoid(g[H:2 * H])
            gg = np.tanh(g[2 * H:3 * H]); o = _np_sigmoid(g[3 * H:])
            c = f * c + i * gg
            h = o * np.tanh(c)
            outs.append(h)
        return np.stack(outs, 0) if outs else np.zeros((0, H), np.float32)

    rnn_out = np.zeros((B, S, 2 * H), np.float32)
    for bi in range(B):
        L = int(length[bi])
        fwd = run_dir(cap[bi, :L], P["wih_f"], P["whh_f"], P["b_f"][0])
        bwd = run_dir(cap[bi, :L][::-1], P["wih_b"], P["whh_b"], P["b_b"][0])[::-1]
        rnn_out[bi, :L, :H] = fwd
        rnn_out[bi, :L, H:] = bwd

    rnn_feat = rnn_out @ P["wrnn"].T + P["brnn"][0]
    hidden = cap + rnn_feat

    att = np.einsum("bsd,bkd->bsk", hidden, k_emb) / np.sqrt(E)
    att = _np_softmax(att, -1)
    max_att = att.max(-1)                                        # (B, S)
    qm = np.repeat(max_att[:, None, :], Q, axis=1).copy()
    qm[span_mask == 0] = -np.finfo(np.float32).max
    qn = _np_softmax(qm, -1)
    p0 = np.einsum("bqs,bsd->bqd", qn, hidden)
    p_emb = p0 @ P["wp"].T + P["bp"][0] + EPS * (p0 @ P["wm"].T + P["bm"][0])
    return p_emb.astype(np.float32), k_emb.astype(np.float32)


# --------------------------------------------------------------------------
if __name__ == "__main__":
    # small shapes consistent with the module: B batch, S caption length,
    # E emb_dim (= LSTM hidden), F feature_dim, K labels, Q phrases, V vocab
    B, S, E, F, K, Q, V = 2, 8, 128, 256, 4, 4, 64

    key = jax.random.PRNGKey(0)
    ks = jax.random.split(key, 24)
    f32 = jnp.float32

    params = {
        "vectors": (jax.random.normal(ks[0], (V, E)) * 0.3).astype(f32),
        "wf": (jax.random.normal(ks[1], (E, F)) / np.sqrt(F)).astype(f32),
        "bf": (jax.random.normal(ks[2], (1, E)) * 0.1).astype(f32),
        "wih_f": (jax.random.normal(ks[3], (4 * E, E)) / np.sqrt(E)).astype(f32),
        "whh_f": (jax.random.normal(ks[4], (4 * E, E)) / np.sqrt(E)).astype(f32),
        "b_f": (jax.random.normal(ks[5], (1, 4 * E)) * 0.1).astype(f32),   # b_ih + b_hh
        "wih_b": (jax.random.normal(ks[6], (4 * E, E)) / np.sqrt(E)).astype(f32),
        "whh_b": (jax.random.normal(ks[7], (4 * E, E)) / np.sqrt(E)).astype(f32),
        "b_b": (jax.random.normal(ks[8], (1, 4 * E)) * 0.1).astype(f32),
        "wrnn": (jax.random.normal(ks[9], (E, 2 * E)) / np.sqrt(2 * E)).astype(f32),
        "brnn": (jax.random.normal(ks[10], (1, E)) * 0.1).astype(f32),
        "wp": (jax.random.normal(ks[11], (E, E)) / np.sqrt(E)).astype(f32),
        "bp": (jax.random.normal(ks[12], (1, E)) * 0.1).astype(f32),
        "wm": (jax.random.normal(ks[13], (E, E)) / np.sqrt(E)).astype(f32),
        "bm": (jax.random.normal(ks[14], (1, E)) * 0.1).astype(f32),
    }

    caption_id = jax.random.randint(ks[15], (B, S), 0, V, dtype=jnp.int32)
    label = jax.random.randint(ks[16], (B, K), 0, V, dtype=jnp.int32)
    feature = jax.random.normal(ks[17], (B, K, F)).astype(f32)
    length = jnp.array([S, S - 3], dtype=jnp.int32)
    span_mask = (jax.random.uniform(ks[18], (B, Q, S)) > 0.5).astype(f32)
    span_mask = span_mask.at[:, :, 0].set(1.0)   # ensure each phrase has >=1 valid token

    p_emb, k_emb = mat_rnn_forward(params, caption_id, span_mask, length, label, feature)
    p_emb = jax.block_until_ready(p_emb)
    k_emb = jax.block_until_ready(k_emb)

    p_ref, k_ref = reference_forward(params, caption_id, span_mask, length, label, feature)
    # bf16 MXU inputs (f32 accumulation) on the big matmuls widen the tolerance vs
    # a pure-f32 path; errors from wrong math would be O(1), so this is still tight.
    np.testing.assert_allclose(np.asarray(k_emb), k_ref, rtol=2e-2, atol=2e-2)
    np.testing.assert_allclose(np.asarray(p_emb), p_ref, rtol=2e-2, atol=2e-2)

    print("KERNEL_OK")
</pallas_src>

<mosaic_0001>
module attributes {stable_mosaic.version = 11 : i64} {
  func.func @_encode_k_kernel(%arg0: i32, %arg1: memref<8x128xf32, #tpu.memory_space<vmem>>, %arg2: memref<8x256xbf16, #tpu.memory_space<vmem>>, %arg3: memref<256x128xbf16, #tpu.memory_space<vmem>>, %arg4: memref<1x128xf32, #tpu.memory_space<vmem>>, %arg5: memref<8x128xf32, #tpu.memory_space<vmem>>) attributes {dimension_semantics = [#tpu.dimension_semantics<arbitrary>], iteration_bounds = array<i64: 1>, scalar_prefetch = 0 : i64, scratch_operands = 0 : i64, tpu.core_type = #tpu.core_type<tc>, window_params = [{pipeline_mode = #tpu.pipeline_mode<synchronous>, transform_indices = @transform_0, window_bounds = array<i64: 8, 128>}, {pipeline_mode = #tpu.pipeline_mode<synchronous>, transform_indices = @transform_1, window_bounds = array<i64: 8, 256>}, {pipeline_mode = #tpu.pipeline_mode<synchronous>, transform_indices = @transform_2, window_bounds = array<i64: 256, 128>}, {pipeline_mode = #tpu.pipeline_mode<synchronous>, transform_indices = @transform_3, window_bounds = array<i64: 1, 128>}, {pipeline_mode = #tpu.pipeline_mode<synchronous>, transform_indices = @transform_4, window_bounds = array<i64: 8, 128>}]} {
    %c0 = arith.constant 0 : index
    %c0_0 = arith.constant 0 : index
    %0 = vector.load %arg2[%c0, %c0_0] : memref<8x256xbf16, #tpu.memory_space<vmem>>, vector<8x256xbf16>
    %c0_1 = arith.constant 0 : index
    %c0_2 = arith.constant 0 : index
    %1 = vector.load %arg3[%c0_1, %c0_2] : memref<256x128xbf16, #tpu.memory_space<vmem>>, vector<256x128xbf16>
    %cst = arith.constant dense<0.000000e+00> : vector<8x128xf32>
    %2 = tpu.matmul %0, %1, %cst {dimension_numbers = #tpu.dot_dimension_numbers<[1], [0], [0], [1], [0, 0, 1, 1], [], []>} : vector<8x256xbf16>, vector<256x128xbf16>, vector<8x128xf32> -> vector<8x128xf32>
    %c0_3 = arith.constant 0 : index
    %c0_4 = arith.constant 0 : index
    %3 = vector.load %arg1[%c0_3, %c0_4] : memref<8x128xf32, #tpu.memory_space<vmem>>, vector<8x128xf32>
    %4 = arith.addf %3, %2 : vector<8x128xf32>
    %c0_5 = arith.constant 0 : index
    %c0_6 = arith.constant 0 : index
    %5 = vector.load %arg4[%c0_5, %c0_6] : memref<1x128xf32, #tpu.memory_space<vmem>>, vector<1x128xf32>
    %6 = vector.broadcast %5 : vector<1x128xf32> to vector<8x128xf32>
    %7 = arith.addf %4, %6 : vector<8x128xf32>
    %c0_7 = arith.constant 0 : index
    %c0_8 = arith.constant 0 : index
    %8 = vector.load %arg5[%c0_7, %c0_8] : memref<8x128xf32, #tpu.memory_space<vmem>>, vector<8x128xf32>
    tpu.vector_store %arg5[%c0_7, %c0_8], %7 {strides = array<i32>} : memref<8x128xf32, #tpu.memory_space<vmem>>, vector<8x128xf32>,
    return
  }
  func.func @transform_0(%arg0: i32) -> (i32, i32) {
    %c0_i32 = arith.constant 0 : i32
    %c0_i32_0 = arith.constant 0 : i32
    %c0_i32_1 = arith.constant 0 : i32
    return %c0_i32, %c0_i32_0 : i32, i32
  }
  func.func @transform_1(%arg0: i32) -> (i32, i32) {
    %c0_i32 = arith.constant 0 : i32
    %c0_i32_0 = arith.constant 0 : i32
    %c0_i32_1 = arith.constant 0 : i32
    return %c0_i32, %c0_i32_0 : i32, i32
  }
  func.func @transform_2(%arg0: i32) -> (i32, i32) {
    %c0_i32 = arith.constant 0 : i32
    %c0_i32_0 = arith.constant 0 : i32
    %c0_i32_1 = arith.constant 0 : i32
    return %c0_i32, %c0_i32_0 : i32, i32
  }
  func.func @transform_3(%arg0: i32) -> (i32, i32) {
    %c0_i32 = arith.constant 0 : i32
    %c0_i32_0 = arith.constant 0 : i32
    %c0_i32_1 = arith.constant 0 : i32
    return %c0_i32, %c0_i32_0 : i32, i32
  }
  func.func @transform_4(%arg0: i32) -> (i32, i32) {
    %c0_i32 = arith.constant 0 : i32
    %c0_i32_0 = arith.constant 0 : i32
    %c0_i32_1 = arith.constant 0 : i32
    return %c0_i32, %c0_i32_0 : i32, i32
  }
}

</mosaic_0001>

<llo_original>
// kernel: tpu_custom_call.1
$region0: #{tpu_custom_call.1}
  #allocation0 [shape = 'u32[]', space=smem, size = 0x4, offset = 0x4, fixed_abs, tag = 'smem constant byte address 0x4 - core index']
  #allocation1 [shape = 'u32[144,128]{1,0:T(1,128)}', space=vmem, size = 0x12000, scoped, tag = 'internal scratch']
  %s0 = inlined_call_operand.hbm [shape: f32[8,128], index: 0, kind: input, shape index: {}]
  %s1 = inlined_call_operand.hbm [shape: bf16[8,256], index: 1, kind: input, shape index: {}]
  %s2 = inlined_call_operand.hbm [shape: bf16[256,128], index: 2, kind: input, shape index: {}]
  %s3 = inlined_call_operand.vmem [shape: f32[1,128], index: 3, kind: input, shape index: {}]
  %s4 = inlined_call_operand.hbm [shape: f32[8,128], index: 4, kind: output, shape index: {}]
  %s5 = sld [smem:[#allocation0]]
  $region38: #{tpu_custom_call.1} parent=0
    _
  %s7 = ssub.s32 1, %s5
  %s8 = scalar_select 0, %s7, %s5
  $region1: #{tpu_custom_call.1} parent=0
    #allocation2 [shape = 'u8[4096]{0}', space=vmem, size = 0x1000, scoped, tag = 'input window, operand 0, single buffered']
    #allocation3 [shape = 's32[1]{0}', space=sflag, size = 0x4, scoped, tag = 'scoped memory for tpu_custom_call.1']
    #allocation4 [shape = 's32[1]{0}', space=sflag, size = 0x4, scoped, tag = 'scoped memory for tpu_custom_call.1']
    #allocation5 [shape = 'u8[4096]{0}', space=vmem, size = 0x1000, scoped, tag = 'input window, operand 1, single buffered']
    #allocation6 [shape = 's32[1]{0}', space=sflag, size = 0x4, scoped, tag = 'scoped memory for tpu_custom_call.1']
    #allocation7 [shape = 'u8[65536]{0}', space=vmem, size = 0x10000, scoped, tag = 'input window, operand 2, single buffered']
    #allocation8 [shape = 'u8[4096]{0}', space=vmem, size = 0x1000, scoped, tag = 'output window, operand 0, single buffered']
    %9 = vsyncpa [#allocation3], 0
    %10 = vsyncpa [#allocation6], 0
    %11 = vsyncpa [#allocation4], 0
    // Predicated region
    $region2: #{tpu_custom_call.1} parent=1 // pred_check
      _
    $region3: #{tpu_custom_call.1} parent=1 // pred_check_branch
      %13 = sbr.rel (0) target = $region5
    $region4: #{tpu_custom_call.1} parent=1 // pred_region
      %s15 = ssub.s32 128, 128
      %16 = vsyncadd [#allocation3], %s15
      %s18 = sshll.u32 [#allocation2], 4
      %s19 = int_to_ptr.vmem [resolvable:$true] %s18
      %21 = dma.hbm_to_vmem [thread:$0]  %s0, 128, %s19, [#allocation3]
    $region5: #{tpu_custom_call.1} parent=1 // pred_fallthru
      _
    // Predicated region
    $region6: #{tpu_custom_call.1} parent=1 // pred_check
      _
    $region7: #{tpu_custom_call.1} parent=1 // pred_check_branch
      %23 = sbr.rel (0) target = $region9
    $region8: #{tpu_custom_call.1} parent=1 // pred_region
      %s25 = ssub.s32 128, 128
      %26 = vsyncadd [#allocation6], %s25
      %s28 = sshll.u32 [#allocation5], 4
      %s29 = int_to_ptr.vmem [resolvable:$true] %s28
      %31 = dma.hbm_to_vmem [thread:$0]  %s1, 128, %s29, [#allocation6]
    $region9: #{tpu_custom_call.1} parent=1 // pred_fallthru
      _
    // Predicated region
    $region10: #{tpu_custom_call.1} parent=1 // pred_check
      _
    $region11: #{tpu_custom_call.1} parent=1 // pred_check_branch
      %33 = sbr.rel (0) target = $region13
    $region12: #{tpu_custom_call.1} parent=1 // pred_region
      %s35 = ssub.s32 2048, 2048
      %36 = vsyncadd [#allocation6], %s35
      %s37 = sshll.u32 [#allocation7], 4
      %s38 = int_to_ptr.vmem [resolvable:$true] %s37
      %43 = dma.hbm_to_vmem [thread:$0]  %s2, 2048, %s38, [#allocation6], 64, 64, 4
    $region13: #{tpu_custom_call.1} parent=1 // pred_fallthru
      _
    // Predicated region
    $region14: #{tpu_custom_call.1} parent=1 // pred_check
      _
    $region15: #{tpu_custom_call.1} parent=1 // pred_check_branch
      %45 = sbr.rel (0) target = $region17
    $region16: #{tpu_custom_call.1} parent=1 // pred_region
      _
    $region17: #{tpu_custom_call.1} parent=1 // pred_fallthru
      _
    // Predicated region
    $region18: #{tpu_custom_call.1} parent=1 // pred_check
      _
    $region19: #{tpu_custom_call.1} parent=1 // pred_check_branch
      %47 = sbr.rel (0) target = $region21
    $region20: #{tpu_custom_call.1} parent=1 // pred_region
      %48 = dma.done [#allocation3], 128
    $region21: #{tpu_custom_call.1} parent=1 // pred_fallthru
      _
    // Predicated region
    $region22: #{tpu_custom_call.1} parent=1 // pred_check
      _
    $region23: #{tpu_custom_call.1} parent=1 // pred_check_branch
      %50 = sbr.rel (0) target = $region25
    $region24: #{tpu_custom_call.1} parent=1 // pred_region
      %51 = dma.done [#allocation6], 128
    $region25: #{tpu_custom_call.1} parent=1 // pred_fallthru
      _
    // Predicated region
    $region26: #{tpu_custom_call.1} parent=1 // pred_check
      _
    $region27: #{tpu_custom_call.1} parent=1 // pred_check_branch
      %53 = sbr.rel (0) target = $region29
    $region28: #{tpu_custom_call.1} parent=1 // pred_region
      %54 = dma.done [#allocation6], 2048
    $region29: #{tpu_custom_call.1} parent=1 // pred_fallthru
      _
    %v56 = vld [vmem:[#allocation5] sm:$0xff]
    %v57 = vld [vmem:[#allocation7] sm:$0xf]
    %v58 = vld [vmem:[#allocation7 + $0x4] sm:$0xf]
    %v59 = vld [vmem:[#allocation7 + $0x8] sm:$0xf]
    %v60 = vld [vmem:[#allocation7 + $0xc] sm:$0xf]
    %v61 = vld [vmem:[#allocation7 + $0x10] sm:$0xf]
    %v62 = vld [vmem:[#allocation7 + $0x14] sm:$0xf]
    %v63 = vld [vmem:[#allocation7 + $0x18] sm:$0xf]
    %v64 = vld [vmem:[#allocation7 + $0x1c] sm:$0xf]
    %v65 = vld [vmem:[#allocation7 + $0x20] sm:$0xf]
    %v66 = vld [vmem:[#allocation7 + $0x24] sm:$0xf]
    %v67 = vld [vmem:[#allocation7 + $0x28] sm:$0xf]
    %v68 = vld [vmem:[#allocation7 + $0x2c] sm:$0xf]
    %v69 = vld [vmem:[#allocation7 + $0x30] sm:$0xf]
    %v70 = vld [vmem:[#allocation7 + $0x34] sm:$0xf]
    %v71 = vld [vmem:[#allocation7 + $0x38] sm:$0xf]
    %v72 = vld [vmem:[#allocation7 + $0x3c] sm:$0xf]
    %v73 = vld [vmem:[#allocation7 + $0x40] sm:$0xf]
    %v74 = vld [vmem:[#allocation7 + $0x44] sm:$0xf]
    %v75 = vld [vmem:[#allocation7 + $0x48] sm:$0xf]
    %v76 = vld [vmem:[#allocation7 + $0x4c] sm:$0xf]
    %v77 = vld [vmem:[#allocation7 + $0x50] sm:$0xf]
    %v78 = vld [vmem:[#allocation7 + $0x54] sm:$0xf]
    %v79 = vld [vmem:[#allocation7 + $0x58] sm:$0xf]
    %v80 = vld [vmem:[#allocation7 + $0x5c] sm:$0xf]
    %v81 = vld [vmem:[#allocation7 + $0x60] sm:$0xf]
    %v82 = vld [vmem:[#allocation7 + $0x64] sm:$0xf]
    %v83 = vld [vmem:[#allocation7 + $0x68] sm:$0xf]
    %v84 = vld [vmem:[#allocation7 + $0x6c] sm:$0xf]
    %v85 = vld [vmem:[#allocation7 + $0x70] sm:$0xf]
    %v86 = vld [vmem:[#allocation7 + $0x74] sm:$0xf]
    %v87 = vld [vmem:[#allocation7 + $0x78] sm:$0xf]
    %v88 = vld [vmem:[#allocation7 + $0x7c] sm:$0xf]
    %v90 = vunpack.c.l.b16 %v56
    %v91 = vunpack.c.h.b16 %v56
    %v92 = vpack.c.b16 %v90, %v90
    %v93 = vpack.c.b16 %v91, %v91
    %v128 = vunpack.c.l.b16 %v57
    %v129 = vunpack.c.l.b16 %v58
    %v130 = vunpack.c.l.b16 %v59
    %v131 = vunpack.c.l.b16 %v60
    %v132 = vunpack.c.l.b16 %v61
    %v133 = vunpack.c.l.b16 %v62
    %v134 = vunpack.c.l.b16 %v63
    %v135 = vunpack.c.l.b16 %v64
    %v136 = vunpack.c.l.b16 %v65
    %v137 = vunpack.c.l.b16 %v66
    %v138 = vunpack.c.l.b16 %v67
    %v139 = vunpack.c.l.b16 %v68
    %v140 = vunpack.c.l.b16 %v69
    %v141 = vunpack.c.l.b16 %v70
    %v142 = vunpack.c.l.b16 %v71
    %v143 = vunpack.c.l.b16 %v72
    %v144 = vunpack.c.l.b16 %v73
    %v145 = vunpack.c.l.b16 %v74
    %v146 = vunpack.c.l.b16 %v75
    %v147 = vunpack.c.l.b16 %v76
    %v148 = vunpack.c.l.b16 %v77
    %v149 = vunpack.c.l.b16 %v78
    %v150 = vunpack.c.l.b16 %v79
    %v151 = vunpack.c.l.b16 %v80
    %v152 = vunpack.c.l.b16 %v81
    %v153 = vunpack.c.l.b16 %v82
    %v154 = vunpack.c.l.b16 %v83
    %v155 = vunpack.c.l.b16 %v84
    %v156 = vunpack.c.l.b16 %v85
    %v157 = vunpack.c.l.b16 %v86
    %v158 = vunpack.c.l.b16 %v87
    %v159 = vunpack.c.l.b16 %v88
    %v160 = vpack.c.b16 %v129, %v128
    %v161 = vpack.c.b16 %v131, %v130
    %v162 = vpack.c.b16 %v133, %v132
    %v163 = vpack.c.b16 %v135, %v134
    %v164 = vpack.c.b16 %v137, %v136
    %v165 = vpack.c.b16 %v139, %v138
    %v166 = vpack.c.b16 %v141, %v140
    %v167 = vpack.c.b16 %v143, %v142
    %v168 = vpack.c.b16 %v145, %v144
    %v169 = vpack.c.b16 %v147, %v146
    %v170 = vpack.c.b16 %v149, %v148
    %v171 = vpack.c.b16 %v151, %v150
    %v172 = vpack.c.b16 %v153, %v152
    %v173 = vpack.c.b16 %v155, %v154
    %v174 = vpack.c.b16 %v157, %v156
    %v175 = vpack.c.b16 %v159, %v158
    %192 = vmatprep.subr.bf16.mxu0 0
    %193 = vmatpush1.bf16.msra.mxu0 %v160
    %194 = vmatprep.subr.bf16.mxu0 0
    %195 = vmatpush1.bf16.msra.mxu0 %v161
    %196 = vmatprep.subr.bf16.mxu0 0
    %197 = vmatpush1.bf16.msra.mxu0 %v162
    %198 = vmatprep.subr.bf16.mxu0 0
    %199 = vmatpush1.bf16.msra.mxu0 %v163
    %200 = vmatprep.subr.bf16.mxu0 0
    %201 = vmatpush1.bf16.msra.mxu0 %v164
    %202 = vmatprep.subr.bf16.mxu0 0
    %203 = vmatpush1.bf16.msra.mxu0 %v165
    %204 = vmatprep.subr.bf16.mxu0 0
    %205 = vmatpush1.bf16.msra.mxu0 %v166
    %206 = vmatprep.subr.bf16.mxu0 0
    %207 = vmatpush1.bf16.msra.mxu0 %v167
    %208 = vmatprep.subr.bf16.mxu0 0
    %209 = vmatpush1.bf16.msra.mxu0 %v168
    %210 = vmatprep.subr.bf16.mxu0 0
    %211 = vmatpush1.bf16.msra.mxu0 %v169
    %212 = vmatprep.subr.bf16.mxu0 0
    %213 = vmatpush1.bf16.msra.mxu0 %v170
    %214 = vmatprep.subr.bf16.mxu0 0
    %215 = vmatpush1.bf16.msra.mxu0 %v171
    %216 = vmatprep.subr.bf16.mxu0 0
    %217 = vmatpush1.bf16.msra.mxu0 %v172
    %218 = vmatprep.subr.bf16.mxu0 0
    %219 = vmatpush1.bf16.msra.mxu0 %v173
    %220 = vmatprep.subr.bf16.mxu0 0
    %221 = vmatpush1.bf16.msra.mxu0 %v174
    %222 = vmatprep.subr.bf16.mxu0 0
    %223 = vmatpush1.bf16.msra.mxu0 %v175
    %224 = vmatprep.mubr.bf16.mxu0 %v93
    %225 = vmatmul.mubr.bf16.gmra.mrb[0].mxu0 %v92
    %v226 = vpop.f32.mrb[0].mxu0
    %v227 = vadd.f32 0.0, %v226
    %v228 = vpop.f32.mrb[0].mxu0
    %v229 = vpop.f32.mrb[0].mxu0
    %v230 = vpop.f32.mrb[0].mxu0
    %231 = vdwg.mxu0
    %v232 = vld [vmem:[#allocation2] sm:$0xff]
    %v233 = vadd.f32 %v232, %v227
    %v234 = vld [vmem:[%s3] sm:$0x1]
    %v236 = vlaneseq
    %v237 = vshrl.u32 %v236, 7
    %v238 = vsub.s32 0, %v237
    %v239 = vrot.slane %v234, %v238
    %v241 = vadd.f32 %v233, %v239
    %242 = vst [vmem:[#allocation8] sm:$0xff] %v241
    // Predicated region
    $region30: #{tpu_custom_call.1} parent=1 // pred_check
      _
    $region31: #{tpu_custom_call.1} parent=1 // pred_check_branch
      %244 = sbr.rel (0) target = $region33
    $region32: #{tpu_custom_call.1} parent=1 // pred_region
      %s246 = ssub.s32 128, 128
      %247 = vsyncadd [#allocation4], %s246
      %s249 = sshll.u32 [#allocation8], 4
      %s250 = int_to_ptr.vmem [resolvable:$true] %s249
      %252 = dma.vmem_to_hbm [thread:$0]  %s250, 128, %s4, [#allocation4]
    $region33: #{tpu_custom_call.1} parent=1 // pred_fallthru
      _
    // Predicated region
    $region34: #{tpu_custom_call.1} parent=1 // pred_check
      _
    $region35: #{tpu_custom_call.1} parent=1 // pred_check_branch
      %254 = sbr.rel (0) target = $region37
    $region36: #{tpu_custom_call.1} parent=1 // pred_region
      %255 = dma.done [#allocation4], 128
    $region37: #{tpu_custom_call.1} parent=1 // pred_fallthru
      _
    %256 = vsyncpa [#allocation3], 1
    %257 = vsyncpa [#allocation6], 1
    %258 = vsyncpa [#allocation4], 1

</llo_original>
